<compile_context>
chip_gen: v5e
topology: v5e:2x2
jax: 0.10.0
libtpu: 0.0.40
codegen_flags: <defaults>
</compile_context>

<pallas_src>
import functools

import jax
import jax.numpy as jnp
from jax import lax
from jax.experimental import pallas as pl
from jax.experimental.pallas import tpu as pltpu

_NUM_CORES = 2  # row-axis split; harmless (outer loop of 2) on 1-TC chips


def _round_up(x, m):
    return (x + m - 1) // m * m


def _loss_kernel(pos_w_ref,      # SMEM (1,) f32   -- scalar prefetch
                 mel_out_ref,    # VMEM (TILE, T)
                 mel_post_ref,   # VMEM (TILE, T)
                 mel_tgt_ref,    # VMEM (TILE, T)
                 gate_out_ref,   # VMEM (B, Tg)    -- resident block
                 gate_tgt_ref,   # VMEM (B, Tg)    -- resident block
                 out_ref,        # VMEM (1, 8, 128) per-core partial block
                 acc_ref,        # VMEM (8, T) f32 scratch
                 *, tile, bm_rows, steps_per_core, inv_n_mel, inv_n_gate,
                 needs_mask):
    c = pl.program_id(0)          # core-split index ("parallel")
    i = pl.program_id(1)          # streaming step within this core ("arbitrary")

    @pl.when(i == 0)
    def _init():
        acc_ref[...] = jnp.zeros_like(acc_ref)

    mo = mel_out_ref[...].astype(jnp.float32)
    mp = mel_post_ref[...].astype(jnp.float32)
    mt = mel_tgt_ref[...].astype(jnp.float32)
    d1 = mo - mt
    d2 = mp - mt
    sq = d1 * d1 + d2 * d2

    if needs_mask:
        # Logical (unclamped) block index; rows >= bm_rows (ragged tail of the
        # last real block, or fully-clamped duplicate tail blocks) contribute 0.
        block = c * steps_per_core + i
        rows = block * tile + lax.broadcasted_iota(jnp.int32, sq.shape, 0)
        sq = jnp.where(rows < bm_rows, sq, 0.0)

    # VPU-only accumulation into an (8, T) slab (groups of 8 sublanes align
    # with the native tile); defer the cross-sublane reduce to finalize.
    t = sq.shape[-1]
    acc_ref[...] += jnp.sum(sq.reshape(tile // 8, 8, t), axis=0)

    @pl.when(i == steps_per_core - 1)
    def _finalize():
        mel_part = jnp.sum(acc_ref[...]) * inv_n_mel

        # Gate BCE-with-logits (pos_weight), tiny; fold into core 0's partial.
        # PyTorch's .view(-1, 1) only reshapes; the mean is unchanged.
        x = gate_out_ref[...].astype(jnp.float32)
        y = gate_tgt_ref[...].astype(jnp.float32)
        w = pos_w_ref[0]
        # Numerically stable softplus(-x) = max(-x, 0) + log1p(exp(-|x|))
        sp_negx = jnp.maximum(-x, 0.0) + jnp.log1p(jnp.exp(-jnp.abs(x)))
        bce = w * y * sp_negx + (1.0 - y) * (x + sp_negx)
        gate_part = jnp.where(c == 0, jnp.sum(bce) * inv_n_gate, 0.0)

        out_ref[...] = jnp.broadcast_to(mel_part + gate_part, out_ref.shape)


def tacotron2_loss(model_output, targets, gate_loss_pos_weight=1.0,
                   tile_rows=None):
    """model_output = (mel_out, mel_out_postnet, gate_out, _);
       targets      = (mel_target, gate_target).
       tile_rows: optional cap on the tile height (testing only)."""
    mel_out, mel_out_postnet, gate_out, _ = model_output
    mel_target, gate_target = targets[0], targets[1]

    B, M, T = mel_out.shape
    BM = B * M
    n_mel = float(BM * T)                       # true element count

    gate_out_2d = gate_out.reshape(B, -1)
    gate_tgt_2d = gate_target.reshape(B, -1)
    Bg, Tg = gate_out_2d.shape
    n_gate = float(Bg * Tg)

    # Free (metadata-only) reshapes; no padding copies.
    mel_out_2d = mel_out.reshape(BM, T)
    mel_post_2d = mel_out_postnet.reshape(BM, T)
    mel_tgt_2d = mel_target.reshape(BM, T)

    # ---- per-generation VMEM budget ----------------------------------------
    try:
        phys_vmem = int(pltpu.get_tpu_info().vmem_capacity_bytes)
    except Exception:
        phys_vmem = 128 * 1024 * 1024
    # Up to half of physical VMEM (v5e/v6e: 128 MiB phys, v7x: 64 MiB), capped
    # to keep headroom for compiler scratch.
    vmem_limit = int(min(phys_vmem // 2, 48 * 1024 * 1024))

    in_itemsizes = [jnp.dtype(a.dtype).itemsize
                    for a in (mel_out_2d, mel_post_2d, mel_tgt_2d)]
    gate_itemsizes = [jnp.dtype(a.dtype).itemsize
                      for a in (gate_out_2d, gate_tgt_2d)]
    # Per tile-row bytes: double-buffered pipeline inputs (mixed dtypes) plus
    # ~5 live f32 temporaries (upcasts / diffs / squares) inside each step.
    per_row_bytes = 2 * sum(in_itemsizes) * T + 5 * 4 * T
    fixed_bytes = (2 * sum(gate_itemsizes) * Bg * Tg     # resident gate blocks
                   + 8 * T * 4                            # accumulator scratch
                   + (1 << 20))                           # slack
    max_tile = max(8, (vmem_limit - fixed_bytes) // per_row_bytes // 8 * 8)
    tile = min(max_tile, _round_up(BM, 8))
    if tile_rows is not None:
        tile = min(tile, max(8, _round_up(tile_rows, 8)))

    total_blocks = pl.cdiv(BM, tile)
    steps_per_core = pl.cdiv(total_blocks, _NUM_CORES)
    needs_mask = (_NUM_CORES * steps_per_core * tile) != BM

    def mel_index(c_idx, i_idx, pw):
        # Clamp: logical blocks past the end re-read the last real block and
        # are fully masked in-kernel (zero contribution).
        return (jnp.minimum(c_idx * steps_per_core + i_idx, total_blocks - 1), 0)

    mel_spec = pl.BlockSpec((tile, T), mel_index)
    gate_spec = pl.BlockSpec((Bg, Tg), lambda c, i, pw: (0, 0))   # resident

    pos_w = jnp.asarray([gate_loss_pos_weight], dtype=jnp.float32)

    kernel = functools.partial(
        _loss_kernel, tile=tile, bm_rows=BM, steps_per_core=steps_per_core,
        inv_n_mel=1.0 / n_mel, inv_n_gate=1.0 / n_gate, needs_mask=needs_mask)

    cost = pl.CostEstimate(
        flops=int(6 * BM * T + 10 * Bg * Tg),
        transcendentals=int(2 * Bg * Tg),
        bytes_accessed=int(BM * T * sum(in_itemsizes)
                           + Bg * Tg * sum(gate_itemsizes)
                           + _NUM_CORES * 8 * 128 * 4))

    partials = pl.pallas_call(
        kernel,
        out_shape=jax.ShapeDtypeStruct((_NUM_CORES, 8, 128), jnp.float32),
        grid_spec=pltpu.PrefetchScalarGridSpec(
            num_scalar_prefetch=1,
            grid=(_NUM_CORES, steps_per_core),
            in_specs=[mel_spec, mel_spec, mel_spec, gate_spec, gate_spec],
            out_specs=pl.BlockSpec((1, 8, 128), lambda c, i, pw: (c, 0, 0)),
            scratch_shapes=[pltpu.VMEM((8, T), jnp.float32)],
        ),
        compiler_params=pltpu.CompilerParams(
            dimension_semantics=("parallel", "arbitrary"),
            vmem_limit_bytes=vmem_limit),
        cost_estimate=cost,
    )(pos_w, mel_out_2d, mel_post_2d, mel_tgt_2d, gate_out_2d, gate_tgt_2d)

    # Per-core partials: mel_sum_c / n_mel  (+ gate term folded into core 0).
    return jnp.sum(partials[:, 0, 0])


def _reference_loss(model_output, targets, gate_loss_pos_weight=1.0):
    mel_out, mel_out_postnet, gate_out, _ = model_output
    mel_target, gate_target = targets[0], targets[1]
    mel_loss = jnp.mean((mel_out - mel_target) ** 2) + \
               jnp.mean((mel_out_postnet - mel_target) ** 2)
    x = gate_out.reshape(-1, 1).astype(jnp.float32)
    y = gate_target.reshape(-1, 1).astype(jnp.float32)
    sp_negx = jnp.maximum(-x, 0.0) + jnp.log1p(jnp.exp(-jnp.abs(x)))
    bce = gate_loss_pos_weight * y * sp_negx + (1.0 - y) * (x + sp_negx)
    return mel_loss + jnp.mean(bce)


if __name__ == "__main__":
    key = jax.random.PRNGKey(0)
    k1, k2, k3, k4, k5 = jax.random.split(key, 5)

    B, M, T = 2, 10, 48   # batch, mel channels, decoder steps
    gate_loss_pos_weight = 5.0

    mel_out = jax.random.normal(k1, (B, M, T), dtype=jnp.float32)
    mel_out_postnet = jax.random.normal(k2, (B, M, T), dtype=jnp.float32)
    mel_target = jax.random.normal(k3, (B, M, T), dtype=jnp.float32)
    gate_out = jax.random.normal(k4, (B, T), dtype=jnp.float32)
    gate_target = (jax.random.uniform(k5, (B, T)) > 0.8).astype(jnp.float32)

    model_output = (mel_out, mel_out_postnet, gate_out, None)
    targets = (mel_target, gate_target)

    # tile_rows=8 forces a multi-step grid with a ragged tail: B*M = 20 rows,
    # 8-row tiles -> 3 real blocks split over the 2-way core axis, so the
    # init / accumulate / mask / clamp / finalize paths all run at toy shapes.
    loss = tacotron2_loss(model_output, targets, gate_loss_pos_weight,
                          tile_rows=8)
    loss = jax.block_until_ready(loss)

    ref = _reference_loss(model_output, targets, gate_loss_pos_weight)
    assert jnp.allclose(loss, ref, rtol=1e-5, atol=1e-5), (loss, ref)

    print("KERNEL_OK")
</pallas_src>

<mosaic_0001>
module attributes {stable_mosaic.version = 11 : i64} {
  func.func @_loss_kernel(%arg0: i32, %arg1: i32, %arg2: memref<1xf32, #tpu.memory_space<smem>>, %arg3: memref<8x48xf32, #tpu.memory_space<vmem>>, %arg4: memref<8x48xf32, #tpu.memory_space<vmem>>, %arg5: memref<8x48xf32, #tpu.memory_space<vmem>>, %arg6: memref<2x48xf32, #tpu.memory_space<vmem>>, %arg7: memref<2x48xf32, #tpu.memory_space<vmem>>, %arg8: memref<1x8x128xf32, #tpu.memory_space<vmem>>, %arg9: memref<8x48xf32, #tpu.memory_space<vmem>>) attributes {dimension_semantics = [#tpu.dimension_semantics<parallel>, #tpu.dimension_semantics<arbitrary>], iteration_bounds = array<i64: 2, 2>, scalar_prefetch = 1 : i64, scratch_operands = 1 : i64, tpu.core_type = #tpu.core_type<tc>, window_params = [{transform_indices = @transform_0, window_bounds = array<i64: 8, 48>}, {transform_indices = @transform_1, window_bounds = array<i64: 8, 48>}, {transform_indices = @transform_2, window_bounds = array<i64: 8, 48>}, {pipeline_mode = #tpu.pipeline_mode<synchronous>, transform_indices = @transform_3, window_bounds = array<i64: 2, 48>}, {pipeline_mode = #tpu.pipeline_mode<synchronous>, transform_indices = @transform_4, window_bounds = array<i64: 2, 48>}, {transform_indices = @transform_5, window_bounds = array<i64: 1, 8, 128>}]} {
    %c0_i32 = arith.constant 0 : i32
    %0 = arith.cmpi eq, %arg1, %c0_i32 : i32
    %1 = arith.extui %0 : i1 to i32
    %c0_i32_0 = arith.constant 0 : i32
    %2 = arith.cmpi ne, %1, %c0_i32_0 : i32
    scf.if %2 {
      %cst_12 = arith.constant 0.000000e+00 : f32
      %29 = vector.broadcast %cst_12 : f32 to vector<8x48xf32>
      %c0_13 = arith.constant 0 : index
      %c0_14 = arith.constant 0 : index
      %30 = vector.load %arg9[%c0_13, %c0_14] : memref<8x48xf32, #tpu.memory_space<vmem>>, vector<8x48xf32>
      tpu.vector_store %arg9[%c0_13, %c0_14], %29 {strides = array<i32>} : memref<8x48xf32, #tpu.memory_space<vmem>>, vector<8x48xf32>,
    } else {
    }
    %c0 = arith.constant 0 : index
    %c0_1 = arith.constant 0 : index
    %3 = vector.load %arg3[%c0, %c0_1] : memref<8x48xf32, #tpu.memory_space<vmem>>, vector<8x48xf32>
    %c0_2 = arith.constant 0 : index
    %c0_3 = arith.constant 0 : index
    %4 = vector.load %arg4[%c0_2, %c0_3] : memref<8x48xf32, #tpu.memory_space<vmem>>, vector<8x48xf32>
    %c0_4 = arith.constant 0 : index
    %c0_5 = arith.constant 0 : index
    %5 = vector.load %arg5[%c0_4, %c0_5] : memref<8x48xf32, #tpu.memory_space<vmem>>, vector<8x48xf32>
    %6 = arith.subf %3, %5 : vector<8x48xf32>
    %7 = arith.subf %4, %5 : vector<8x48xf32>
    %8 = arith.mulf %6, %6 : vector<8x48xf32>
    %9 = arith.mulf %7, %7 : vector<8x48xf32>
    %10 = arith.addf %8, %9 : vector<8x48xf32>
    %c2_i32 = arith.constant 2 : i32
    %11 = arith.muli %arg0, %c2_i32 : i32
    %12 = arith.addi %11, %arg1 : i32
    %c8_i32 = arith.constant 8 : i32
    %13 = arith.muli %12, %c8_i32 : i32
    %14 = tpu.iota {dimensions = array<i32: 0>} : vector<8x48xi32>
    %15 = vector.broadcast %13 : i32 to vector<8x48xi32>
    %16 = arith.addi %15, %14 : vector<8x48xi32>
    %c20_i32 = arith.constant 20 : i32
    %17 = vector.broadcast %c20_i32 : i32 to vector<8x48xi32>
    %18 = arith.cmpi slt, %16, %17 : vector<8x48xi32>
    %cst = arith.constant 0.000000e+00 : f32
    %19 = vector.broadcast %cst : f32 to vector<8x48xf32>
    %20 = arith.select %18, %10, %19 : vector<8x48xi1>, vector<8x48xf32>
    %c0_6 = arith.constant 0 : index
    %c0_7 = arith.constant 0 : index
    %21 = vector.load %arg9[%c0_6, %c0_7] : memref<8x48xf32, #tpu.memory_space<vmem>>, vector<8x48xf32>
    %22 = vector.shape_cast %20 : vector<8x48xf32> to vector<1x8x48xf32>
    %cst_8 = arith.constant dense<0.000000e+00> : vector<8x48xf32>
    %23 = vector.multi_reduction <add>, %22, %cst_8 [0] : vector<1x8x48xf32> to vector<8x48xf32>
    %24 = arith.addf %21, %23 : vector<8x48xf32>
    %c0_9 = arith.constant 0 : index
    %c0_10 = arith.constant 0 : index
    %25 = vector.load %arg9[%c0_9, %c0_10] : memref<8x48xf32, #tpu.memory_space<vmem>>, vector<8x48xf32>
    tpu.vector_store %arg9[%c0_9, %c0_10], %24 {strides = array<i32>} : memref<8x48xf32, #tpu.memory_space<vmem>>, vector<8x48xf32>,
    %c1_i32 = arith.constant 1 : i32
    %26 = arith.cmpi eq, %arg1, %c1_i32 : i32
    %27 = arith.extui %26 : i1 to i32
    %c0_i32_11 = arith.constant 0 : i32
    %28 = arith.cmpi ne, %27, %c0_i32_11 : i32
    scf.if %28 {
      %c0_12 = arith.constant 0 : index
      %c0_13 = arith.constant 0 : index
      %29 = vector.load %arg9[%c0_12, %c0_13] : memref<8x48xf32, #tpu.memory_space<vmem>>, vector<8x48xf32>
      %30 = vector.shape_cast %29 : vector<8x48xf32> to vector<1x8x48xf32>
      %cst_14 = arith.constant dense<0.000000e+00> : vector<1xf32>
      %31 = vector.multi_reduction <add>, %30, %cst_14 [1, 2] : vector<1x8x48xf32> to vector<1xf32>
      %32 = vector.shape_cast %31 : vector<1xf32> to vector<1x1x1xf32>
      %33 = vector.extract %32[0, 0, 0] : f32 from vector<1x1x1xf32>
      %cst_15 = arith.constant 0.00104166672 : f32
      %34 = arith.mulf %33, %cst_15 : f32
      %c0_16 = arith.constant 0 : index
      %c0_17 = arith.constant 0 : index
      %35 = vector.load %arg6[%c0_16, %c0_17] : memref<2x48xf32, #tpu.memory_space<vmem>>, vector<2x48xf32>
      %c0_18 = arith.constant 0 : index
      %c0_19 = arith.constant 0 : index
      %36 = vector.load %arg7[%c0_18, %c0_19] : memref<2x48xf32, #tpu.memory_space<vmem>>, vector<2x48xf32>
      %c0_20 = arith.constant 0 : index
      %37 = memref.load %arg2[%c0_20] : memref<1xf32, #tpu.memory_space<smem>>
      %cst_21 = arith.constant 0.000000e+00 : f32
      %38 = vector.broadcast %cst_21 : f32 to vector<2x48xf32>
      %39 = arith.subf %38, %35 : vector<2x48xf32>
      %cst_22 = arith.constant 0.000000e+00 : f32
      %40 = vector.broadcast %cst_22 : f32 to vector<2x48xf32>
      %41 = arith.maximumf %39, %40 : vector<2x48xf32>
      %42 = math.absf %35 : vector<2x48xf32>
      %cst_23 = arith.constant 0.000000e+00 : f32
      %43 = vector.broadcast %cst_23 : f32 to vector<2x48xf32>
      %44 = arith.subf %43, %42 : vector<2x48xf32>
      %45 = math.exp %44 : vector<2x48xf32>
      %46 = math.log1p %45 : vector<2x48xf32>
      %47 = arith.addf %41, %46 : vector<2x48xf32>
      %48 = vector.broadcast %37 : f32 to vector<2x48xf32>
      %49 = arith.mulf %48, %36 : vector<2x48xf32>
      %50 = arith.mulf %49, %47 : vector<2x48xf32>
      %cst_24 = arith.constant 1.000000e+00 : f32
      %51 = vector.broadcast %cst_24 : f32 to vector<2x48xf32>
      %52 = arith.subf %51, %36 : vector<2x48xf32>
      %53 = arith.addf %35, %47 : vector<2x48xf32>
      %54 = arith.mulf %52, %53 : vector<2x48xf32>
      %55 = arith.addf %50, %54 : vector<2x48xf32>
      %c0_i32_25 = arith.constant 0 : i32
      %56 = arith.cmpi eq, %arg0, %c0_i32_25 : i32
      %57 = vector.shape_cast %55 : vector<2x48xf32> to vector<1x2x48xf32>
      %cst_26 = arith.constant dense<0.000000e+00> : vector<1xf32>
      %58 = vector.multi_reduction <add>, %57, %cst_26 [1, 2] : vector<1x2x48xf32> to vector<1xf32>
      %59 = vector.shape_cast %58 : vector<1xf32> to vector<1x1x1xf32>
      %60 = vector.extract %59[0, 0, 0] : f32 from vector<1x1x1xf32>
      %cst_27 = arith.constant 0.010416667 : f32
      %61 = arith.mulf %60, %cst_27 : f32
      %cst_28 = arith.constant 0.000000e+00 : f32
      %62 = arith.select %56, %61, %cst_28 : f32
      %63 = arith.addf %34, %62 : f32
      %64 = vector.broadcast %63 : f32 to vector<1x8x128xf32>
      %c0_29 = arith.constant 0 : index
      %c0_30 = arith.constant 0 : index
      %c0_31 = arith.constant 0 : index
      %65 = vector.load %arg8[%c0_29, %c0_30, %c0_31] : memref<1x8x128xf32, #tpu.memory_space<vmem>>, vector<1x8x128xf32>
      tpu.vector_store %arg8[%c0_29, %c0_30, %c0_31], %64 {strides = array<i32>} : memref<1x8x128xf32, #tpu.memory_space<vmem>>, vector<1x8x128xf32>,
    } else {
    }
    return
  }
  func.func @transform_0(%arg0: i32, %arg1: i32, %arg2: memref<1xf32, #tpu.memory_space<smem>>) -> (i32, i32) {
    %c2_i32 = arith.constant 2 : i32
    %0 = arith.muli %arg0, %c2_i32 : i32
    %1 = arith.addi %0, %arg1 : i32
    %c2_i32_0 = arith.constant 2 : i32
    %2 = arith.minsi %1, %c2_i32_0 : i32
    %c0_i32 = arith.constant 0 : i32
    %c0_i32_1 = arith.constant 0 : i32
    return %2, %c0_i32 : i32, i32
  }
  func.func @transform_1(%arg0: i32, %arg1: i32, %arg2: memref<1xf32, #tpu.memory_space<smem>>) -> (i32, i32) {
    %c2_i32 = arith.constant 2 : i32
    %0 = arith.muli %arg0, %c2_i32 : i32
    %1 = arith.addi %0, %arg1 : i32
    %c2_i32_0 = arith.constant 2 : i32
    %2 = arith.minsi %1, %c2_i32_0 : i32
    %c0_i32 = arith.constant 0 : i32
    %c0_i32_1 = arith.constant 0 : i32
    return %2, %c0_i32 : i32, i32
  }
  func.func @transform_2(%arg0: i32, %arg1: i32, %arg2: memref<1xf32, #tpu.memory_space<smem>>) -> (i32, i32) {
    %c2_i32 = arith.constant 2 : i32
    %0 = arith.muli %arg0, %c2_i32 : i32
    %1 = arith.addi %0, %arg1 : i32
    %c2_i32_0 = arith.constant 2 : i32
    %2 = arith.minsi %1, %c2_i32_0 : i32
    %c0_i32 = arith.constant 0 : i32
    %c0_i32_1 = arith.constant 0 : i32
    return %2, %c0_i32 : i32, i32
  }
  func.func @transform_3(%arg0: i32, %arg1: i32, %arg2: memref<1xf32, #tpu.memory_space<smem>>) -> (i32, i32) {
    %c0_i32 = arith.constant 0 : i32
    %c0_i32_0 = arith.constant 0 : i32
    %c0_i32_1 = arith.constant 0 : i32
    return %c0_i32, %c0_i32_0 : i32, i32
  }
  func.func @transform_4(%arg0: i32, %arg1: i32, %arg2: memref<1xf32, #tpu.memory_space<smem>>) -> (i32, i32) {
    %c0_i32 = arith.constant 0 : i32
    %c0_i32_0 = arith.constant 0 : i32
    %c0_i32_1 = arith.constant 0 : i32
    return %c0_i32, %c0_i32_0 : i32, i32
  }
  func.func @transform_5(%arg0: i32, %arg1: i32, %arg2: memref<1xf32, #tpu.memory_space<smem>>) -> (i32, i32, i32) {
    %c0_i32 = arith.constant 0 : i32
    %c0_i32_0 = arith.constant 0 : i32
    %c0_i32_1 = arith.constant 0 : i32
    return %arg0, %c0_i32, %c0_i32_0 : i32, i32, i32
  }
}

</mosaic_0001>

<llo_original>
// kernel: tpu_custom_call.1
$region0: #{tpu_custom_call.1}
  #allocation0 [shape = 'u32[]', space=smem, size = 0x4, offset = 0x4, fixed_abs, tag = 'smem constant byte address 0x4 - core index']
  #allocation1 [shape = 'u32[72,128]{1,0:T(1,128)}', space=vmem, size = 0x9000, scoped, tag = 'internal scratch']
  #allocation2 [shape = 'f32[8,48]{1,0:T(8,128)}', space=vmem, size = 0x1000, scoped, tag = 'scratch operand']
  #allocation3 [shape = 's32[1]{0}', space=sflag, size = 0x4, scoped, tag = 'scoped memory for tpu_custom_call.1']
  #allocation4 [shape = 'f32[1]{0:T(128)S(6)}', space=smem, size = 0x200, scoped, tag = 'prefetched SMEM operand 0']
  %s0 = inlined_call_operand.<no memory space> [shape: f32[1], index: 0, kind: input, shape index: {}]
  %s1 = inlined_call_operand.hbm [shape: f32[20,48], index: 1, kind: input, shape index: {}]
  %s2 = inlined_call_operand.hbm [shape: f32[20,48], index: 2, kind: input, shape index: {}]
  %s3 = inlined_call_operand.hbm [shape: f32[20,48], index: 3, kind: input, shape index: {}]
  %s4 = inlined_call_operand.vmem [shape: f32[2,48], index: 4, kind: input, shape index: {}]
  %s5 = inlined_call_operand.vmem [shape: f32[2,48], index: 5, kind: input, shape index: {}]
  %s6 = inlined_call_operand.hbm [shape: f32[2,8,128], index: 6, kind: output, shape index: {}]
  %s7 = sld [smem:[#allocation0]]
  $region73: #{tpu_custom_call.1} parent=0
    _
  %s9 = ssub.s32 1, %s7
  %s10 = scalar_select 0, %s9, %s7
  %11 = sst [smem:[#allocation4]] %s0
  $region1: #{tpu_custom_call.1} parent=0
    #allocation5 [shape = 'u8[8192]{0}', space=vmem, size = 0x2000, scoped, tag = 'input window, operand 1']
    #allocation6 [shape = 's32[2]{0}', space=sflag, size = 0x8, scoped, tag = 'scoped memory for tpu_custom_call.1']
    #allocation7 [shape = 's32[2]{0}', space=sflag, size = 0x8, scoped, tag = 'scoped memory for tpu_custom_call.1']
    #allocation8 [shape = 'u8[8192]{0}', space=vmem, size = 0x2000, scoped, tag = 'input window, operand 2']
    #allocation9 [shape = 's32[2]{0}', space=sflag, size = 0x8, scoped, tag = 'scoped memory for tpu_custom_call.1']
    #allocation10 [shape = 'u8[8192]{0}', space=vmem, size = 0x2000, scoped, tag = 'input window, operand 3']
    #allocation11 [shape = 'u8[8192]{0}', space=vmem, size = 0x2000, scoped, tag = 'output window, operand 0']
    %12 = vsyncpa [#allocation6], 0
    %s13 = scalar_lea.sflag [#allocation6], 1
    %14 = vsyncpa %s13, 0
    %15 = vsyncpa [#allocation9], 0
    %s16 = scalar_lea.sflag [#allocation9], 1
    %17 = vsyncpa %s16, 0
    %18 = vsyncpa [#allocation7], 0
    %s19 = scalar_lea.sflag [#allocation7], 1
    %20 = vsyncpa %s19, 0
    loop: start=0, step=1, limit=6
    $region2: #{tpu_custom_call.1} parent=1 // loop_pre_header
      _
    $region3: #{tpu_custom_call.1} parent=1 // loop_header
      %s22 = sphi 0, %s26
      %p23 = scmp.ge.s32.totalorder %s22, 6
      %s29 = sphi 0, %s41
      %s30 = sphi 0, %s37
      %s31 = sphi 0, %s29
      %s32 = sphi 0, %s30
      %s33 = sphi 0, %s31
      %s34 = sphi 0, %s32
      %s52 = sphi 0, %s54
      %s55 = sphi 0, %s52
      %s56 = sphi 0, %s55
      %s72 = sphi 0, %s56
      %s86 = sphi 0, %s88
      %s89 = sphi 0, %s86
      %s90 = sphi 0, %s89
      %s106 = sphi 0, %s90
      %s120 = sphi 0, %s122
      %s123 = sphi 0, %s120
      %s124 = sphi 0, %s123
      %s140 = sphi 0, %s124
      %s144 = sphi 0, %s144
      %s146 = sphi 0, %s144
      %s147 = sphi 0, %s146
      %s161 = sphi 0, %s147
      %s165 = sphi 0, %s165
      %s167 = sphi 0, %s165
      %s168 = sphi 0, %s167
      %s182 = sphi 0, %s168
      %s188 = sphi 0, %s190
      %s191 = sphi 0, %s188
      %s192 = sphi 0, %s191
      %s208 = sphi 0, %s192
    $region4: #{tpu_custom_call.1} parent=1 // loop_header_branch
      %25 = sbr.rel (%p23) target = $region8
    $region5: #{tpu_custom_call.1} parent=1 // loop_body
      %s27 = ssub.s32 %s22, 1
      %s28 = ssub.s32 %s22, 2
      %s35 = sadd.s32 1, %s30
      %p36 = scmp.ge.s32.totalorder %s35, 2
      %s37 = scalar_select %p36, 0, %s35
      %s38 = sadd.s32 1, %s29
      %s39 = scalar_select %p36, %s38, %s29
      %p40 = scmp.ge.s32.totalorder %s39, 2
      %s41 = scalar_select %p40, 0, %s39
      %s42 = smul.u32 %s29, 2
      %s43 = sadd.s32 %s42, %s30
      %p44 = scmp.lt.s32.totalorder %s43, 2
      %s45 = scalar_select %p44, %s43, 2
      %s46 = smul.u32 %s41, 2
      %s47 = sadd.s32 %s46, %s37
      %p48 = scmp.lt.s32.totalorder %s47, 2
      %s49 = scalar_select %p48, %s47, 2
      %s50 = ssub.s32 %s45, %s49
      %p51 = scmp.eq.s32.totalorder %s50, 0
      %s53 = sadd.s32 %s52, 1
      %s54 = scalar_select %p51, %s52, %s53
      %p57 = pneg %p51
      %p58 = scmp.eq.s32.totalorder %s22, 3
      %p59 = por %p57, %p58
      %p60 = scmp.ne.s32.totalorder %s52, %s55
      %p61 = scmp.eq.s32.totalorder %s22, 0
      %p62 = por %p60, %p61
      %p63 = scmp.ne.s32.totalorder %s52, %s55
      %p64 = scmp.eq.s32.totalorder %s27, 3
      %p65 = por %p63, %p64
      %p66 = scmp.ne.s32.totalorder %s55, %s56
      %p67 = scmp.eq.s32.totalorder %s27, 0
      %p68 = por %p66, %p67
      %p69 = scmp.ne.s32.totalorder %s55, %s56
      %p70 = scmp.eq.s32.totalorder %s28, 3
      %p71 = por %p69, %p70
      %p73 = scmp.ne.s32.totalorder %s56, %s72
      %p74 = scmp.eq.s32.totalorder %s28, 0
      %p75 = por %p73, %p74
      %s76 = smul.u32 %s29, 2
      %s77 = sadd.s32 %s76, %s30
      %p78 = scmp.lt.s32.totalorder %s77, 2
      %s79 = scalar_select %p78, %s77, 2
      %s80 = smul.u32 %s41, 2
      %s81 = sadd.s32 %s80, %s37
      %p82 = scmp.lt.s32.totalorder %s81, 2
      %s83 = scalar_select %p82, %s81, 2
      %s84 = ssub.s32 %s79, %s83
      %p85 = scmp.eq.s32.totalorder %s84, 0
      %s87 = sadd.s32 %s86, 1
      %s88 = scalar_select %p85, %s86, %s87
      %p91 = pneg %p85
      %p92 = scmp.eq.s32.totalorder %s22, 3
      %p93 = por %p91, %p92
      %p94 = scmp.ne.s32.totalorder %s86, %s89
      %p95 = scmp.eq.s32.totalorder %s22, 0
      %p96 = por %p94, %p95
      %p97 = scmp.ne.s32.totalorder %s86, %s89
      %p98 = scmp.eq.s32.totalorder %s27, 3
      %p99 = por %p97, %p98
      %p100 = scmp.ne.s32.totalorder %s89, %s90
      %p101 = scmp.eq.s32.totalorder %s27, 0
      %p102 = por %p100, %p101
      %p103 = scmp.ne.s32.totalorder %s89, %s90
      %p104 = scmp.eq.s32.totalorder %s28, 3
      %p105 = por %p103, %p104
      %p107 = scmp.ne.s32.totalorder %s90, %s106
      %p108 = scmp.eq.s32.totalorder %s28, 0
      %p109 = por %p107, %p108
      %s110 = smul.u32 %s29, 2
      %s111 = sadd.s32 %s110, %s30
      %p112 = scmp.lt.s32.totalorder %s111, 2
      %s113 = scalar_select %p112, %s111, 2
      %s114 = smul.u32 %s41, 2
      %s115 = sadd.s32 %s114, %s37
      %p116 = scmp.lt.s32.totalorder %s115, 2
      %s117 = scalar_select %p116, %s115, 2
      %s118 = ssub.s32 %s113, %s117
      %p119 = scmp.eq.s32.totalorder %s118, 0
      %s121 = sadd.s32 %s120, 1
      %s122 = scalar_select %p119, %s120, %s121
      %p125 = pneg %p119
      %p126 = scmp.eq.s32.totalorder %s22, 3
      %p127 = por %p125, %p126
      %p128 = scmp.ne.s32.totalorder %s120, %s123
      %p129 = scmp.eq.s32.totalorder %s22, 0
      %p130 = por %p128, %p129
      %p131 = scmp.ne.s32.totalorder %s120, %s123
      %p132 = scmp.eq.s32.totalorder %s27, 3
      %p133 = por %p131, %p132
      %p134 = scmp.ne.s32.totalorder %s123, %s124
      %p135 = scmp.eq.s32.totalorder %s27, 0
      %p136 = por %p134, %p135
      %p137 = scmp.ne.s32.totalorder %s123, %s124
      %p138 = scmp.eq.s32.totalorder %s28, 3
      %p139 = por %p137, %p138
      %p141 = scmp.ne.s32.totalorder %s124, %s140
      %p142 = scmp.eq.s32.totalorder %s28, 0
      %p143 = por %p141, %p142
      %s145 = sadd.s32 %s144, 1
      %p148 = scmp.eq.s32.totalorder %s22, 3
      %p149 = scmp.ne.s32.totalorder %s144, %s146
      %p150 = scmp.eq.s32.totalorder %s22, 0
      %p151 = por %p149, %p150
      %p152 = scmp.ne.s32.totalorder %s144, %s146
      %p153 = scmp.eq.s32.totalorder %s27, 3
      %p154 = por %p152, %p153
      %p155 = scmp.ne.s32.totalorder %s146, %s147
      %p156 = scmp.eq.s32.totalorder %s27, 0
      %p157 = por %p155, %p156
      %p158 = scmp.ne.s32.totalorder %s146, %s147
      %p159 = scmp.eq.s32.totalorder %s28, 3
      %p160 = por %p158, %p159
      %p162 = scmp.ne.s32.totalorder %s147, %s161
      %p163 = scmp.eq.s32.totalorder %s28, 0
      %p164 = por %p162, %p163
      %s166 = sadd.s32 %s165, 1
      %p169 = scmp.eq.s32.totalorder %s22, 3
      %p170 = scmp.ne.s32.totalorder %s165, %s167
      %p171 = scmp.eq.s32.totalorder %s22, 0
      %p172 = por %p170, %p171
      %p173 = scmp.ne.s32.totalorder %s165, %s167
      %p174 = scmp.eq.s32.totalorder %s27, 3
      %p175 = por %p173, %p174
      %p176 = scmp.ne.s32.totalorder %s167, %s168
      %p177 = scmp.eq.s32.totalorder %s27, 0
      %p178 = por %p176, %p177
      %p179 = scmp.ne.s32.totalorder %s167, %s168
      %p180 = scmp.eq.s32.totalorder %s28, 3
      %p181 = por %p179, %p180
      %p183 = scmp.ne.s32.totalorder %s168, %s182
      %p184 = scmp.eq.s32.totalorder %s28, 0
      %p185 = por %p183, %p184
      %s186 = ssub.s32 %s29, %s41
      %p187 = scmp.eq.s32.totalorder %s186, 0
      %s189 = sadd.s32 %s188, 1
      %s190 = scalar_select %p187, %s188, %s189
      %p193 = pneg %p187
      %p194 = scmp.eq.s32.totalorder %s22, 3
      %p195 = por %p193, %p194
      %p196 = scmp.ne.s32.totalorder %s188, %s191
      %p197 = scmp.eq.s32.totalorder %s22, 0
      %p198 = por %p196, %p197
      %p199 = scmp.ne.s32.totalorder %s188, %s191
      %p200 = scmp.eq.s32.totalorder %s27, 3
      %p201 = por %p199, %p200
      %p202 = scmp.ne.s32.totalorder %s191, %s192
      %p203 = scmp.eq.s32.totalorder %s27, 0
      %p204 = por %p202, %p203
      %p205 = scmp.ne.s32.totalorder %s191, %s192
      %p206 = scmp.eq.s32.totalorder %s28, 3
      %p207 = por %p205, %p206
      %p209 = scmp.ne.s32.totalorder %s192, %s208
      %p210 = scmp.eq.s32.totalorder %s28, 0
      %p211 = por %p209, %p210
      %p212 = scmp.le.s32.totalorder 1, %s22
      %p213 = scmp.lt.s32.totalorder %s22, 5
      %p214 = pnand %p212, %p213
      %p215 = pneg %p214
      // Predicated region
      $region9: #{tpu_custom_call.1} parent=5 // pred_check
        _
      $region10: #{tpu_custom_call.1} parent=5 // pred_check_branch
        %217 = sbr.rel (%p214) target = $region12
      $region11: #{tpu_custom_call.1} parent=5 // pred_region
        %s218 = ssub.s32 %s22, 1
        // Predicated region
        $region13: #{tpu_custom_call.1} parent=11 // pred_check
          %p219 = pneg %p157
        $region14: #{tpu_custom_call.1} parent=11 // pred_check_branch
          %221 = sbr.rel (%p219) target = $region16
        $region15: #{tpu_custom_call.1} parent=11 // pred_region
          _
        $region16: #{tpu_custom_call.1} parent=11 // pred_fallthru
          _
        // Predicated region
        $region17: #{tpu_custom_call.1} parent=11 // pred_check
          %p222 = pneg %p178
        $region18: #{tpu_custom_call.1} parent=11 // pred_check_branch
          %224 = sbr.rel (%p222) target = $region20
        $region19: #{tpu_custom_call.1} parent=11 // pred_region
          _
        $region20: #{tpu_custom_call.1} parent=11 // pred_fallthru
          _
      $region12: #{tpu_custom_call.1} parent=5 // pred_fallthru
        _
      %p225 = scmp.lt.s32.totalorder %s22, 4
      // Predicated region
      $region21: #{tpu_custom_call.1} parent=5 // pred_check
        %p226 = pneg %p225
      $region22: #{tpu_custom_call.1} parent=5 // pred_check_branch
        %228 = sbr.rel (%p226) target = $region24
      $region23: #{tpu_custom_call.1} parent=5 // pred_region
        // Predicated region
        $region25: #{tpu_custom_call.1} parent=23 // pred_check
          %p229 = pneg %p62
        $region26: #{tpu_custom_call.1} parent=23 // pred_check_branch
          %231 = sbr.rel (%p229) target = $region28
        $region27: #{tpu_custom_call.1} parent=23 // pred_region
          %s232 = sand.u32 %s52, 1
          %s233 = scalar_lea.sflag [#allocation6], %s232
          %s234 = sand.u32 %s52, 1
          %s235 = smul.addr %s234, 8
          %s236 = scalar_lea.vmem [#allocation5], %s235
          %s237 = smul.u32 %s29, 2
          %s238 = sadd.s32 %s237, %s30
          %p239 = scmp.lt.s32.totalorder %s238, 2
          %s240 = scalar_select %p239, %s238, 2
          %242 = vsyncadd %s233, 0
          %s243 = smul.addr %s240, 8
          %s244 = scalar_lea.hbm %s1, %s243
          %s246 = sshll.u32 %s244, 4
          %s247 = int_to_ptr.hbm [resolvable:$true] %s246
          %s248 = sshll.u32 %s236, 4
          %s249 = int_to_ptr.vmem [resolvable:$true] %s248
          %251 = dma.hbm_to_vmem [thread:$0]  %s247, 128, %s249, %s233
        $region28: #{tpu_custom_call.1} parent=23 // pred_fallthru
          _
        // Predicated region
        $region29: #{tpu_custom_call.1} parent=23 // pred_check
          %p252 = pneg %p96
        $region30: #{tpu_custom_call.1} parent=23 // pred_check_branch
          %254 = sbr.rel (%p252) target = $region32
        $region31: #{tpu_custom_call.1} parent=23 // pred_region
          %s255 = sand.u32 %s22, 1
          %s256 = scalar_lea.sflag [#allocation9], %s255
          %s257 = sand.u32 %s86, 1
          %s258 = smul.addr %s257, 8
          %s259 = scalar_lea.vmem [#allocation8], %s258
          %s260 = smul.u32 %s29, 2
          %s261 = sadd.s32 %s260, %s30
          %p262 = scmp.lt.s32.totalorder %s261, 2
          %s263 = scalar_select %p262, %s261, 2
          %265 = vsyncadd %s256, 0
          %s266 = smul.addr %s263, 8
          %s267 = scalar_lea.hbm %s2, %s266
          %s269 = sshll.u32 %s267, 4
          %s270 = int_to_ptr.hbm [resolvable:$true] %s269
          %s271 = sshll.u32 %s259, 4
          %s272 = int_to_ptr.vmem [resolvable:$true] %s271
          %274 = dma.hbm_to_vmem [thread:$0]  %s270, 128, %s272, %s256
        $region32: #{tpu_custom_call.1} parent=23 // pred_fallthru
          _
        // Predicated region
        $region33: #{tpu_custom_call.1} parent=23 // pred_check
          %p275 = pneg %p130
        $region34: #{tpu_custom_call.1} parent=23 // pred_check_branch
          %277 = sbr.rel (%p275) target = $region36
        $region35: #{tpu_custom_call.1} parent=23 // pred_region
          %s278 = sand.u32 %s22, 1
          %s279 = scalar_lea.sflag [#allocation9], %s278
          %s280 = sand.u32 %s120, 1
          %s281 = smul.addr %s280, 8
          %s282 = scalar_lea.vmem [#allocation10], %s281
          %s283 = smul.u32 %s29, 2
          %s284 = sadd.s32 %s283, %s30
          %p285 = scmp.lt.s32.totalorder %s284, 2
          %s286 = scalar_select %p285, %s284, 2
          %288 = vsyncadd %s279, 0
          %s289 = smul.addr %s286, 8
          %s290 = scalar_lea.hbm %s3, %s289
          %s292 = sshll.u32 %s290, 4
          %s293 = int_to_ptr.hbm [resolvable:$true] %s292
          %s294 = sshll.u32 %s282, 4
          %s295 = int_to_ptr.vmem [resolvable:$true] %s294
          %297 = dma.hbm_to_vmem [thread:$0]  %s293, 128, %s295, %s279
        $region36: #{tpu_custom_call.1} parent=23 // pred_fallthru
          _
      $region24: #{tpu_custom_call.1} parent=5 // pred_fallthru
        _
      %p298 = scmp.le.s32.totalorder 1, %s22
      %p299 = scmp.lt.s32.totalorder %s22, 5
      %p300 = pnand %p298, %p299
      %p301 = pneg %p300
      // Predicated region
      $region37: #{tpu_custom_call.1} parent=5 // pred_check
        _
      $region38: #{tpu_custom_call.1} parent=5 // pred_check_branch
        %303 = sbr.rel (%p300) target = $region40
      $region39: #{tpu_custom_call.1} parent=5 // pred_region
        %s304 = ssub.s32 %s22, 1
        %s305 = sand.u32 %s55, 1
        %s306 = scalar_lea.sflag [#allocation6], %s305
        %s307 = sand.u32 %s55, 1
        %s308 = smul.addr %s307, 8
        %s309 = scalar_lea.vmem [#allocation5], %s308
        // Predicated region
        $region41: #{tpu_custom_call.1} parent=39 // pred_check
          %p310 = pneg %p68
        $region42: #{tpu_custom_call.1} parent=39 // pred_check_branch
          %312 = sbr.rel (%p310) target = $region44
        $region43: #{tpu_custom_call.1} parent=39 // pred_region
          %314 = dma.done %s306, 128
        $region44: #{tpu_custom_call.1} parent=39 // pred_fallthru
          _
        %s315 = sand.u32 %s27, 1
        %s316 = scalar_lea.sflag [#allocation9], %s315
        %s317 = sand.u32 %s89, 1
        %s318 = smul.addr %s317, 8
        %s319 = scalar_lea.vmem [#allocation8], %s318
        // Predicated region
        $region45: #{tpu_custom_call.1} parent=39 // pred_check
          %p320 = pneg %p102
        $region46: #{tpu_custom_call.1} parent=39 // pred_check_branch
          %322 = sbr.rel (%p320) target = $region48
        $region47: #{tpu_custom_call.1} parent=39 // pred_region
          %324 = dma.done %s316, 128
        $region48: #{tpu_custom_call.1} parent=39 // pred_fallthru
          _
        %s325 = sand.u32 %s27, 1
        %s326 = scalar_lea.sflag [#allocation9], %s325
        %s327 = sand.u32 %s123, 1
        %s328 = smul.addr %s327, 8
        %s329 = scalar_lea.vmem [#allocation10], %s328
        // Predicated region
        $region49: #{tpu_custom_call.1} parent=39 // pred_check
          %p330 = pneg %p136
        $region50: #{tpu_custom_call.1} parent=39 // pred_check_branch
          %332 = sbr.rel (%p330) target = $region52
        $region51: #{tpu_custom_call.1} parent=39 // pred_region
          %334 = dma.done %s326, 128
        $region52: #{tpu_custom_call.1} parent=39 // pred_fallthru
          _
        %s335 = sand.u32 %s55, 1
        %s336 = scalar_lea.sflag [#allocation6], %s335
        %s337 = sand.u32 %s55, 1
        %s338 = smul.addr %s337, 8
        %s339 = scalar_lea.vmem [#allocation5], %s338
        %p340 = pneg %p68
        %p341 = pneg %p65
        %s342 = sand.u32 %s27, 1
        %s343 = scalar_lea.sflag [#allocation9], %s342
        %s344 = sand.u32 %s89, 1
        %s345 = smul.addr %s344, 8
        %s346 = scalar_lea.vmem [#allocation8], %s345
        %p347 = pneg %p102
        %p348 = pneg %p99
        %s349 = sand.u32 %s27, 1
        %s350 = scalar_lea.sflag [#allocation9], %s349
        %s351 = sand.u32 %s123, 1
        %s352 = smul.addr %s351, 8
        %s353 = scalar_lea.vmem [#allocation10], %s352
        %p354 = pneg %p136
        %p355 = pneg %p133
        %p356 = pneg %p157
        %p357 = pneg %p154
        %p358 = pneg %p178
        %p359 = pneg %p175
        %p360 = pneg %p204
        %p361 = pneg %p201
        %s362 = sand.u32 %s191, 1
        %s363 = scalar_lea.sflag [#allocation7], %s362
        %s364 = sand.u32 %s191, 1
        %s365 = smul.addr %s364, 8
        %s366 = scalar_lea.vmem [#allocation11], %s365
        %s367 = smul.u32 %s31, 2
        %s368 = sadd.s32 %s367, %s32
        %p369 = scmp.lt.s32.totalorder %s368, 2
        %s370 = scalar_select %p369, %s368, 2
        %s371 = smul.u32 %s31, 2
        %s372 = sadd.s32 %s371, %s32
        %p373 = scmp.lt.s32.totalorder %s372, 2
        %s374 = scalar_select %p373, %s372, 2
        %s375 = smul.u32 %s31, 2
        %s376 = sadd.s32 %s375, %s32
        %p377 = scmp.lt.s32.totalorder %s376, 2
        %s378 = scalar_select %p377, %s376, 2
        %p379 = scmp.eq.s32.totalorder %s32, 0
        // Predicated region
        $region53: #{tpu_custom_call.1} parent=39 // pred_check
          %p380 = pneg %p379
        $region54: #{tpu_custom_call.1} parent=39 // pred_check_branch
          %382 = sbr.rel (%p380) target = $region56
        $region55: #{tpu_custom_call.1} parent=39 // pred_region
          %vm383 = vcmask 392192
          %384 = vst.msk [vmem:[#allocation2] sm:$0xff] %vm383, 0.0
        $region56: #{tpu_custom_call.1} parent=39 // pred_fallthru
          _
        %v385 = vld [vmem:[%s309] sm:$0xff]
        %v386 = vld [vmem:[%s319] sm:$0xff]
        %v387 = vld [vmem:[%s329] sm:$0xff]
        %v388 = vsub.f32 %v385, %v387
        %v389 = vsub.f32 %v386, %v387
        %v390 = vmul.f32 %v388, %v388
        %v391 = vmul.f32 %v389, %v389
        %v392 = vadd.f32 %v390, %v391
        %s393 = smul.u32 %s31, 2
        %s394 = sadd.s32 %s393, %s32
        %s395 = smul.u32 %s394, 8
        %v396 = vlaneseq
        %v397 = vshrl.u32 %v396, 7
        %v398 = vstv %s395
        %v399 = vadd.s32 %v398, %v397
        %vm400 = vcmp.lt.s32.totalorder %v399, 20
        %v401 = vsel %vm400, %v392, 0.0
        %v402 = vld [vmem:[#allocation2] sm:$0xff]
        %v403 = vadd.f32 %v401, 0.0
        %v404 = vadd.f32 %v402, %v403
        %vm405 = vcmask 392192
        %406 = vst.msk [vmem:[#allocation2] sm:$0xff] %vm405, %v404
        %p407 = scmp.eq.s32.totalorder %s32, 1
        // Predicated region
        $region57: #{tpu_custom_call.1} parent=39 // pred_check
          %p408 = pneg %p407
        $region58: #{tpu_custom_call.1} parent=39 // pred_check_branch
          %410 = sbr.rel (%p408) target = $region60
        $region59: #{tpu_custom_call.1} parent=39 // pred_region
          %v411 = vld [vmem:[#allocation2] sm:$0xff]
          %v412 = vsel %vm405, %v411, 0.0
          %413 = vadd.xlane.f32.xlu0 %v412
          %v414 = vpop.xlane.xlu0 %413
          %v415 = vrot.slane %v414, 4
          %v416 = vadd.f32 %v414, %v415
          %v417 = vrot.slane %v416, 2
          %v418 = vadd.f32 %v416, %v417
          %v419 = vrot.slane %v418, 1
          %v420 = vadd.f32 %v418, %v419
          %s421 = vtos %v420
          %s422 = smul.f32 %s421, 0.0010416667
          %v423 = vld [vmem:[%s4] sm:$0x3]
          %v424 = vld [vmem:[%s5] sm:$0x3]
          %s425 = sld [smem:[#allocation4]]
          %v426 = vsub.f32 0.0, %v423
          %v427 = vmax.f32 %v426, 0.0
          %v428 = vand.u32 2147483647, %v423
          %v429 = vsub.f32 0.0, %v428
          %v430 = vmul.f32 %v429, 1.442695
          %v431 = vpow.pop %v430
          %v432 = vadd.f32 %v431, 1.0
          %v433 = vlog2.pop %v432
          %v434 = vmul.f32 %v433, 0.6931472
          %v435 = vmul.f32 -0.5, %v431
          %v436 = vadd.f32 %v435, 1.0
          %v437 = vmul.f32 %v436, %v431
          %v438 = vand.u32 2147483647, %v431
          %vm439 = vcmp.lt.f32.partialorder %v438, 0.0004427343
          %v440 = vsel %vm439, %v437, %v434
          %v441 = vadd.f32 %v427, %v440
          %v442 = vstv %s425
          %v443 = vmul.f32 %v442, %v424
          %v444 = vmul.f32 %v443, %v441
          %v445 = vsub.f32 1.0, %v424
          %v446 = vadd.f32 %v423, %v441
          %v447 = vmul.f32 %v445, %v446
          %v448 = vadd.f32 %v444, %v447
          %p449 = scmp.eq.s32.totalorder %s31, 0
          %vm450 = vcmask 386048
          %v451 = vsel %vm450, %v448, 0.0
          %452 = vadd.xlane.f32.xlu0 %v451
          %v453 = vpop.xlane.xlu0 %452
          %v454 = vrot.slane %v453, 4
          %v455 = vadd.f32 %v453, %v454
          %v456 = vrot.slane %v455, 2
          %v457 = vadd.f32 %v455, %v456
          %v458 = vrot.slane %v457, 1
          %v459 = vadd.f32 %v457, %v458
          %s460 = vtos %v459
          %s461 = smul.f32 %s460, 0.010416667
          %s462 = scalar_select %p449, %s461, 0.0
          %s463 = sadd.f32 %s422, %s462
          %v464 = vstv %s463
          %465 = vst [vmem:[%s366] sm:$0xff] %v464
        $region60: #{tpu_custom_call.1} parent=39 // pred_fallthru
          _
        %s466 = sand.u32 %s191, 1
        %s467 = scalar_lea.sflag [#allocation7], %s466
        %s468 = sand.u32 %s191, 1
        %s469 = smul.addr %s468, 8
        %s470 = scalar_lea.vmem [#allocation11], %s469
        // Predicated region
        $region61: #{tpu_custom_call.1} parent=39 // pred_check
          %p471 = pneg %p201
        $region62: #{tpu_custom_call.1} parent=39 // pred_check_branch
          %473 = sbr.rel (%p471) target = $region64
        $region63: #{tpu_custom_call.1} parent=39 // pred_region
          %475 = vsyncadd %s467, 0
          %s476 = smul.addr %s31, 8
          %s477 = scalar_lea.hbm %s6, %s476
          %s479 = sshll.u32 %s470, 4
          %s480 = int_to_ptr.vmem [resolvable:$true] %s479
          %s481 = sshll.u32 %s477, 4
          %s482 = int_to_ptr.hbm [resolvable:$true] %s481
          %484 = dma.vmem_to_hbm [thread:$0]  %s480, 128, %s482, %s467
        $region64: #{tpu_custom_call.1} parent=39 // pred_fallthru
          _
      $region40: #{tpu_custom_call.1} parent=5 // pred_fallthru
        _
      %p485 = scmp.le.s32.totalorder 2, %s22
      // Predicated region
      $region65: #{tpu_custom_call.1} parent=5 // pred_check
        %p486 = pneg %p485
      $region66: #{tpu_custom_call.1} parent=5 // pred_check_branch
        %488 = sbr.rel (%p486) target = $region68
      $region67: #{tpu_custom_call.1} parent=5 // pred_region
        %s489 = ssub.s32 %s22, 2
        // Predicated region
        $region69: #{tpu_custom_call.1} parent=67 // pred_check
          %p490 = pneg %p207
        $region70: #{tpu_custom_call.1} parent=67 // pred_check_branch
          %492 = sbr.rel (%p490) target = $region72
        $region71: #{tpu_custom_call.1} parent=67 // pred_region
          %s493 = sand.u32 %s192, 1
          %s494 = scalar_lea.sflag [#allocation7], %s493
          %s495 = sand.u32 %s192, 1
          %s496 = smul.addr %s495, 8
          %s497 = scalar_lea.vmem [#allocation11], %s496
          %499 = dma.done %s494, 128
        $region72: #{tpu_custom_call.1} parent=67 // pred_fallthru
          _
      $region68: #{tpu_custom_call.1} parent=5 // pred_fallthru
        _
    $region6: #{tpu_custom_call.1} parent=1 // loop_footer
      %s26 = sadd.s32 1, %s22
    $region7: #{tpu_custom_call.1} parent=1 // loop_footer_branch
      %21 = sbr.rel target = $region3
    $region8: #{tpu_custom_call.1} parent=1 // loop_exit
      _
    %500 = vsyncpa [#allocation6], 1
    %s501 = scalar_lea.sflag [#allocation6], 1
    %502 = vsyncpa %s501, 1
    %503 = vsyncpa [#allocation9], 1
    %s504 = scalar_lea.sflag [#allocation9], 1
    %505 = vsyncpa %s504, 1
    %506 = vsyncpa [#allocation7], 1
    %s507 = scalar_lea.sflag [#allocation7], 1
    %508 = vsyncpa %s507, 1

</llo_original>
